<compile_context>
chip_gen: v6e
topology: v6e:2x2x1
jax: 0.10.0
libtpu: 0.0.40
codegen_flags: <defaults>
</compile_context>

<pallas_src>
import math
from functools import partial

import jax
import jax.numpy as jnp
from jax.experimental import pallas as pl
from jax.experimental.pallas import tpu as pltpu

_LANE = 128


def _encoding3d_kernel(x_ref, bte_ref, ph_ref, out_ref, *, pack):
    # x_ref:   (rows, 3*pack)   point-major: point k of a row is cols [3k:3k+3]
    # bte_ref: (3, 2F)          [2*pi*B^T | 2*pi*B^T]
    # ph_ref:  (1, 2F)          [0 ... 0 | pi/2 ... pi/2]   (cos(a) = sin(a+pi/2))
    # out_ref: (rows, pack*2F)  point k occupies cols [k*2F : (k+1)*2F]
    b0 = bte_ref[0:1, :]
    b1 = bte_ref[1:2, :]
    b2 = bte_ref[2:3, :]
    ph = ph_ref[...]
    segs = []
    for k in range(pack):  # static unroll; pack is a small power of two
        x0 = x_ref[:, 3 * k + 0: 3 * k + 1]
        x1 = x_ref[:, 3 * k + 1: 3 * k + 2]
        x2 = x_ref[:, 3 * k + 2: 3 * k + 3]
        # K=3 contraction as f32 VPU FMAs; phase folded into the same slab.
        segs.append(x0 * b0 + x1 * b1 + x2 * b2 + ph)          # (rows, 2F)
    arg = segs[0] if pack == 1 else jnp.concatenate(segs, axis=-1)
    # One dense sin over a 128-multiple-wide slab, one unmasked full-width store.
    out_ref[...] = jnp.sin(arg).astype(out_ref.dtype)


def _round_up(x, m):
    return ((x + m - 1) // m) * m


def _vmem_capacity_bytes():
    try:
        return int(pltpu.get_tpu_info().vmem_capacity_bytes)
    except Exception:
        return 64 * 1024 * 1024  # v7x-safe fallback


def _pick_rows_per_tile(rows_total, in_row_bytes, out_row_bytes, vmem_budget):
    """Rows (of the packed output) per grid step.

    Sized so (input block + output block) * 2 buffers fits the budget, rounded
    to a sublane-friendly multiple, and capped so large inputs keep >= ~8 grid
    steps (v7x megacore sharding / pipeline depth)."""
    per_row = 2 * (in_row_bytes + out_row_bytes)          # double-buffered in + out
    rows = max(32, (vmem_budget // per_row) // 32 * 32)
    rows_grid = _round_up(max(32, -(-rows_total // 8)), 32)
    rows = min(rows, rows_grid)
    if rows >= rows_total:
        return rows_total          # single full-extent block (always legal)
    return rows


@partial(jax.jit, static_argnames=("out_dtype",))
def encoding3d_forward(x, B, *, out_dtype=None):
    """Pallas equivalent of Encoding3D.forward.

    x: (..., 3) coordinates; B: (F, 3) fixed random projection.
    returns (..., 2F) = concat(sin(2*pi*x@B.T), cos(2*pi*x@B.T), axis=-1).
    """
    feat = B.shape[0]
    two_f = 2 * feat
    pack = _LANE // math.gcd(_LANE, two_f)        # output row width pack*2F % 128 == 0
    width = pack * two_f
    out_dt = jnp.dtype(x.dtype if out_dtype is None else out_dtype)

    lead_shape = x.shape[:-1]
    n = 1
    for d in lead_shape:
        n *= d
    x_flat = x.reshape(n, 3).astype(jnp.float32)

    # Pad only to the lane-pack factor (< pack extra points); never to a tile.
    n_pad = _round_up(max(n, 1), pack)
    if n_pad != n:
        x_flat = jnp.pad(x_flat, ((0, n_pad - n), (0, 0)))
    rows_total = n_pad // pack
    x_packed = x_flat.reshape(rows_total, 3 * pack)       # contiguous row-major reshape

    # Tiny constants: 2*pi folded once; phase implements cos via sin(a + pi/2).
    bt = (2.0 * math.pi) * B.astype(jnp.float32).T        # (3, F)
    bte = jnp.concatenate([bt, bt], axis=1)               # (3, 2F)
    ph = jnp.concatenate(
        [jnp.zeros((1, feat), jnp.float32),
         jnp.full((1, feat), 0.5 * math.pi, jnp.float32)], axis=1)   # (1, 2F)

    # ---- tiling: size blocks from the actual VMEM capacity -------------------
    in_row_bytes = _round_up(3 * pack, _LANE) * 4    # input block lane-pads to 128 in VMEM
    out_row_bytes = width * out_dt.itemsize
    cap = _vmem_capacity_bytes()
    rows_tile = _pick_rows_per_tile(rows_total, in_row_bytes, out_row_bytes, cap // 2)
    grid = pl.cdiv(rows_total, rows_tile)
    need = 2 * (in_row_bytes + out_row_bytes) * rows_tile
    vmem_limit = int(min(cap, max(need + (4 << 20), 32 << 20)))

    kernel = partial(_encoding3d_kernel, pack=pack)
    cost = pl.CostEstimate(
        flops=12 * n_pad * feat,
        transcendentals=2 * n_pad * feat,        # one fused sin per output element
        bytes_accessed=rows_total * (in_row_bytes + out_row_bytes) + (bte.size + ph.size) * 4,
    )

    out_packed = pl.pallas_call(
        kernel,
        out_shape=jax.ShapeDtypeStruct((rows_total, width), out_dt),
        grid_spec=pltpu.PrefetchScalarGridSpec(
            num_scalar_prefetch=0,
            grid=(grid,),
            in_specs=[
                # (rows_tile, 3*pack): last dim equals the full array dim -> legal.
                pl.BlockSpec((rows_tile, 3 * pack), lambda i: (i, 0)),
                # Tiny constants: every grid step sees the full block.
                pl.BlockSpec((3, two_f), lambda i: (0, 0)),
                pl.BlockSpec((1, two_f), lambda i: (0, 0)),
            ],
            out_specs=pl.BlockSpec((rows_tile, width), lambda i: (i, 0)),
        ),
        compiler_params=pltpu.CompilerParams(
            dimension_semantics=("parallel",),
            vmem_limit_bytes=vmem_limit,
        ),
        cost_estimate=cost,
    )(x_packed, bte, ph)

    # Unpack to (..., 2F). This reshape is row-major contiguous; the slice only
    # happens in the rare case where n was not a multiple of the pack factor.
    out = out_packed.reshape(n_pad, two_f)
    if n_pad != n:
        out = out[:n]
    return out.reshape(*lead_shape, two_f)


def make_encoding3d_params(encoding_features, sigma, key):
    # Matches torch.normal(mean=0, std=sigma**2, size=(F, 3)) from the module
    # (std = sigma**2 is intentional per the reference implementation).
    return (sigma ** 2) * jax.random.normal(
        key, (encoding_features, 3), dtype=jnp.float32
    )


if __name__ == "__main__":
    encoding_features = 32
    sigma = 1.0

    key = jax.random.PRNGKey(0)
    k_b, k_x = jax.random.split(key)

    # Small deterministic example: batch=2, 8x8 spatial grid of 3-D coordinates.
    B = make_encoding3d_params(encoding_features, sigma, k_b)
    x = jax.random.uniform(k_x, (2, 8, 8, 3), dtype=jnp.float32)

    out = encoding3d_forward(x, B)
    out = jax.block_until_ready(out)

    # Pure-JAX elementwise reference (exact f32, no MXU involved).
    proj_ref = (2.0 * math.pi) * (
        x[..., 0:1] * B[:, 0] + x[..., 1:2] * B[:, 1] + x[..., 2:3] * B[:, 2]
    )
    ref = jnp.concatenate([jnp.sin(proj_ref), jnp.cos(proj_ref)], axis=-1)

    assert out.shape == (2, 8, 8, 2 * encoding_features), out.shape
    err = float(jnp.max(jnp.abs(out - ref)))
    assert jnp.allclose(out, ref, atol=1e-3, rtol=1e-3), err

    print("KERNEL_OK")
</pallas_src>

<mosaic_0001>
module attributes {stable_mosaic.version = 11 : i64} {
  func.func @_encoding3d_kernel(%arg0: i32, %arg1: memref<32x6xf32, #tpu.memory_space<vmem>>, %arg2: memref<3x64xf32, #tpu.memory_space<vmem>>, %arg3: memref<1x64xf32, #tpu.memory_space<vmem>>, %arg4: memref<32x128xf32, #tpu.memory_space<vmem>>) attributes {dimension_semantics = [#tpu.dimension_semantics<parallel>], iteration_bounds = array<i64: 2>, scalar_prefetch = 0 : i64, scratch_operands = 0 : i64, tpu.core_type = #tpu.core_type<tc>, window_params = [{transform_indices = @transform_0, window_bounds = array<i64: 32, 6>}, {pipeline_mode = #tpu.pipeline_mode<synchronous>, transform_indices = @transform_1, window_bounds = array<i64: 3, 64>}, {pipeline_mode = #tpu.pipeline_mode<synchronous>, transform_indices = @transform_2, window_bounds = array<i64: 1, 64>}, {transform_indices = @transform_3, window_bounds = array<i64: 32, 128>}]} {
    %c0 = arith.constant 0 : index
    %c0_0 = arith.constant 0 : index
    %0 = vector.load %arg2[%c0, %c0_0] : memref<3x64xf32, #tpu.memory_space<vmem>>, vector<1x64xf32>
    %c1 = arith.constant 1 : index
    %c0_1 = arith.constant 0 : index
    %1 = vector.load %arg2[%c1, %c0_1] : memref<3x64xf32, #tpu.memory_space<vmem>>, vector<1x64xf32>
    %c2 = arith.constant 2 : index
    %c0_2 = arith.constant 0 : index
    %2 = vector.load %arg2[%c2, %c0_2] : memref<3x64xf32, #tpu.memory_space<vmem>>, vector<1x64xf32>
    %c0_3 = arith.constant 0 : index
    %c0_4 = arith.constant 0 : index
    %3 = vector.load %arg3[%c0_3, %c0_4] : memref<1x64xf32, #tpu.memory_space<vmem>>, vector<1x64xf32>
    %c0_5 = arith.constant 0 : index
    %c0_6 = arith.constant 0 : index
    %4 = vector.load %arg1[%c0_5, %c0_6] : memref<32x6xf32, #tpu.memory_space<vmem>>, vector<32x1xf32>
    %c0_7 = arith.constant 0 : index
    %c1_8 = arith.constant 1 : index
    %5 = vector.load %arg1[%c0_7, %c1_8] : memref<32x6xf32, #tpu.memory_space<vmem>>, vector<32x1xf32>
    %c0_9 = arith.constant 0 : index
    %c2_10 = arith.constant 2 : index
    %6 = vector.load %arg1[%c0_9, %c2_10] : memref<32x6xf32, #tpu.memory_space<vmem>>, vector<32x1xf32>
    %7 = vector.broadcast %4 : vector<32x1xf32> to vector<32x64xf32>
    %8 = vector.broadcast %0 : vector<1x64xf32> to vector<32x64xf32>
    %9 = arith.mulf %7, %8 : vector<32x64xf32>
    %10 = vector.broadcast %5 : vector<32x1xf32> to vector<32x64xf32>
    %11 = vector.broadcast %1 : vector<1x64xf32> to vector<32x64xf32>
    %12 = arith.mulf %10, %11 : vector<32x64xf32>
    %13 = arith.addf %9, %12 : vector<32x64xf32>
    %14 = vector.broadcast %6 : vector<32x1xf32> to vector<32x64xf32>
    %15 = vector.broadcast %2 : vector<1x64xf32> to vector<32x64xf32>
    %16 = arith.mulf %14, %15 : vector<32x64xf32>
    %17 = arith.addf %13, %16 : vector<32x64xf32>
    %18 = vector.broadcast %3 : vector<1x64xf32> to vector<32x64xf32>
    %19 = arith.addf %17, %18 : vector<32x64xf32>
    %c0_11 = arith.constant 0 : index
    %c3 = arith.constant 3 : index
    %20 = vector.load %arg1[%c0_11, %c3] : memref<32x6xf32, #tpu.memory_space<vmem>>, vector<32x1xf32>
    %c0_12 = arith.constant 0 : index
    %c4 = arith.constant 4 : index
    %21 = vector.load %arg1[%c0_12, %c4] : memref<32x6xf32, #tpu.memory_space<vmem>>, vector<32x1xf32>
    %c0_13 = arith.constant 0 : index
    %c5 = arith.constant 5 : index
    %22 = vector.load %arg1[%c0_13, %c5] : memref<32x6xf32, #tpu.memory_space<vmem>>, vector<32x1xf32>
    %23 = vector.broadcast %20 : vector<32x1xf32> to vector<32x64xf32>
    %24 = vector.broadcast %0 : vector<1x64xf32> to vector<32x64xf32>
    %25 = arith.mulf %23, %24 : vector<32x64xf32>
    %26 = vector.broadcast %21 : vector<32x1xf32> to vector<32x64xf32>
    %27 = vector.broadcast %1 : vector<1x64xf32> to vector<32x64xf32>
    %28 = arith.mulf %26, %27 : vector<32x64xf32>
    %29 = arith.addf %25, %28 : vector<32x64xf32>
    %30 = vector.broadcast %22 : vector<32x1xf32> to vector<32x64xf32>
    %31 = vector.broadcast %2 : vector<1x64xf32> to vector<32x64xf32>
    %32 = arith.mulf %30, %31 : vector<32x64xf32>
    %33 = arith.addf %29, %32 : vector<32x64xf32>
    %34 = vector.broadcast %3 : vector<1x64xf32> to vector<32x64xf32>
    %35 = arith.addf %33, %34 : vector<32x64xf32>
    %36 = tpu.concatenate %19, %35 in 1 : vector<32x64xf32>, vector<32x64xf32> -> vector<32x128xf32>
    %37 = math.sin %36 : vector<32x128xf32>
    %c0_14 = arith.constant 0 : index
    %c0_15 = arith.constant 0 : index
    %38 = vector.load %arg4[%c0_14, %c0_15] : memref<32x128xf32, #tpu.memory_space<vmem>>, vector<32x128xf32>
    tpu.vector_store %arg4[%c0_14, %c0_15], %37 {strides = array<i32>} : memref<32x128xf32, #tpu.memory_space<vmem>>, vector<32x128xf32>,
    return
  }
  func.func @transform_0(%arg0: i32) -> (i32, i32) {
    %c0_i32 = arith.constant 0 : i32
    %c0_i32_0 = arith.constant 0 : i32
    return %arg0, %c0_i32 : i32, i32
  }
  func.func @transform_1(%arg0: i32) -> (i32, i32) {
    %c0_i32 = arith.constant 0 : i32
    %c0_i32_0 = arith.constant 0 : i32
    %c0_i32_1 = arith.constant 0 : i32
    return %c0_i32, %c0_i32_0 : i32, i32
  }
  func.func @transform_2(%arg0: i32) -> (i32, i32) {
    %c0_i32 = arith.constant 0 : i32
    %c0_i32_0 = arith.constant 0 : i32
    %c0_i32_1 = arith.constant 0 : i32
    return %c0_i32, %c0_i32_0 : i32, i32
  }
  func.func @transform_3(%arg0: i32) -> (i32, i32) {
    %c0_i32 = arith.constant 0 : i32
    %c0_i32_0 = arith.constant 0 : i32
    return %arg0, %c0_i32 : i32, i32
  }
}

</mosaic_0001>

<llo_original>
// kernel: encoding3d_forward.1
$region0: #{encoding3d_forward.1}
  #allocation0 [shape = 'u32[]', space=smem, size = 0x4, offset = 0x4, fixed_abs, tag = 'smem constant byte address 0x4 - core index']
  #allocation1 [shape = 'u32[144,128]{1,0:T(1,128)}', space=vmem, size = 0x12000, scoped, tag = 'internal scratch']
  %s0 = inlined_call_operand.vmem [shape: f32[64,6], index: 0, kind: input, shape index: {}]
  %s1 = inlined_call_operand.vmem [shape: f32[3,64], index: 1, kind: input, shape index: {}]
  %s2 = inlined_call_operand.vmem [shape: f32[1,64], index: 2, kind: input, shape index: {}]
  %s3 = inlined_call_operand.vmem [shape: f32[64,128], index: 3, kind: output, shape index: {}]
  %s4 = sld [smem:[#allocation0]]
  $region45: #{encoding3d_forward.1} parent=0
    _
  %s6 = ssub.s32 1, %s4
  %s7 = scalar_select 0, %s6, %s4
  loop: start=0, step=1, limit=4
  $region2: #{encoding3d_forward.1} parent=0 // loop_pre_header
    _
  $region3: #{encoding3d_forward.1} parent=0 // loop_header
    %s9 = sphi 0, %s13
    %p10 = scmp.ge.s32.totalorder %s9, 4
    %s19 = sphi 0, %s21
    %s22 = sphi 0, %s19
    %s23 = sphi 0, %s22
    %s39 = sphi 0, %s23
    %s43 = sphi 0, %s43
    %s45 = sphi 0, %s43
    %s46 = sphi 0, %s45
    %s60 = sphi 0, %s46
    %s64 = sphi 0, %s64
    %s66 = sphi 0, %s64
    %s67 = sphi 0, %s66
    %s81 = sphi 0, %s67
    %s87 = sphi 0, %s89
    %s90 = sphi 0, %s87
    %s91 = sphi 0, %s90
    %s107 = sphi 0, %s91
  $region4: #{encoding3d_forward.1} parent=0 // loop_header_branch
    %12 = sbr.rel (%p10) target = $region8
  $region5: #{encoding3d_forward.1} parent=0 // loop_body
    %s14 = ssub.s32 %s9, 1
    %s15 = ssub.s32 %s9, 2
    %s16 = sadd.s32 %s9, 1
    %s17 = ssub.s32 %s9, %s16
    %p18 = scmp.eq.s32.totalorder %s17, 0
    %s20 = sadd.s32 %s19, 1
    %s21 = scalar_select %p18, %s19, %s20
    %p24 = pneg %p18
    %p25 = scmp.eq.s32.totalorder %s9, 1
    %p26 = por %p24, %p25
    %p27 = scmp.ne.s32.totalorder %s19, %s22
    %p28 = scmp.eq.s32.totalorder %s9, 0
    %p29 = por %p27, %p28
    %p30 = scmp.ne.s32.totalorder %s19, %s22
    %p31 = scmp.eq.s32.totalorder %s14, 1
    %p32 = por %p30, %p31
    %p33 = scmp.ne.s32.totalorder %s22, %s23
    %p34 = scmp.eq.s32.totalorder %s14, 0
    %p35 = por %p33, %p34
    %p36 = scmp.ne.s32.totalorder %s22, %s23
    %p37 = scmp.eq.s32.totalorder %s15, 1
    %p38 = por %p36, %p37
    %p40 = scmp.ne.s32.totalorder %s23, %s39
    %p41 = scmp.eq.s32.totalorder %s15, 0
    %p42 = por %p40, %p41
    %s44 = sadd.s32 %s43, 1
    %p47 = scmp.eq.s32.totalorder %s9, 1
    %p48 = scmp.ne.s32.totalorder %s43, %s45
    %p49 = scmp.eq.s32.totalorder %s9, 0
    %p50 = por %p48, %p49
    %p51 = scmp.ne.s32.totalorder %s43, %s45
    %p52 = scmp.eq.s32.totalorder %s14, 1
    %p53 = por %p51, %p52
    %p54 = scmp.ne.s32.totalorder %s45, %s46
    %p55 = scmp.eq.s32.totalorder %s14, 0
    %p56 = por %p54, %p55
    %p57 = scmp.ne.s32.totalorder %s45, %s46
    %p58 = scmp.eq.s32.totalorder %s15, 1
    %p59 = por %p57, %p58
    %p61 = scmp.ne.s32.totalorder %s46, %s60
    %p62 = scmp.eq.s32.totalorder %s15, 0
    %p63 = por %p61, %p62
    %s65 = sadd.s32 %s64, 1
    %p68 = scmp.eq.s32.totalorder %s9, 1
    %p69 = scmp.ne.s32.totalorder %s64, %s66
    %p70 = scmp.eq.s32.totalorder %s9, 0
    %p71 = por %p69, %p70
    %p72 = scmp.ne.s32.totalorder %s64, %s66
    %p73 = scmp.eq.s32.totalorder %s14, 1
    %p74 = por %p72, %p73
    %p75 = scmp.ne.s32.totalorder %s66, %s67
    %p76 = scmp.eq.s32.totalorder %s14, 0
    %p77 = por %p75, %p76
    %p78 = scmp.ne.s32.totalorder %s66, %s67
    %p79 = scmp.eq.s32.totalorder %s15, 1
    %p80 = por %p78, %p79
    %p82 = scmp.ne.s32.totalorder %s67, %s81
    %p83 = scmp.eq.s32.totalorder %s15, 0
    %p84 = por %p82, %p83
    %s85 = ssub.s32 %s9, %s16
    %p86 = scmp.eq.s32.totalorder %s85, 0
    %s88 = sadd.s32 %s87, 1
    %s89 = scalar_select %p86, %s87, %s88
    %p92 = pneg %p86
    %p93 = scmp.eq.s32.totalorder %s9, 1
    %p94 = por %p92, %p93
    %p95 = scmp.ne.s32.totalorder %s87, %s90
    %p96 = scmp.eq.s32.totalorder %s9, 0
    %p97 = por %p95, %p96
    %p98 = scmp.ne.s32.totalorder %s87, %s90
    %p99 = scmp.eq.s32.totalorder %s14, 1
    %p100 = por %p98, %p99
    %p101 = scmp.ne.s32.totalorder %s90, %s91
    %p102 = scmp.eq.s32.totalorder %s14, 0
    %p103 = por %p101, %p102
    %p104 = scmp.ne.s32.totalorder %s90, %s91
    %p105 = scmp.eq.s32.totalorder %s15, 1
    %p106 = por %p104, %p105
    %p108 = scmp.ne.s32.totalorder %s91, %s107
    %p109 = scmp.eq.s32.totalorder %s15, 0
    %p110 = por %p108, %p109
    %p111 = scmp.le.s32.totalorder 1, %s9
    %p112 = scmp.lt.s32.totalorder %s9, 3
    %p113 = pnand %p111, %p112
    %p114 = pneg %p113
    // Predicated region
    $region9: #{encoding3d_forward.1} parent=5 // pred_check
      _
    $region10: #{encoding3d_forward.1} parent=5 // pred_check_branch
      %116 = sbr.rel (%p113) target = $region12
    $region11: #{encoding3d_forward.1} parent=5 // pred_region
      %s117 = ssub.s32 %s9, 1
      // Predicated region
      $region13: #{encoding3d_forward.1} parent=11 // pred_check
        %p118 = pneg %p56
      $region14: #{encoding3d_forward.1} parent=11 // pred_check_branch
        %120 = sbr.rel (%p118) target = $region16
      $region15: #{encoding3d_forward.1} parent=11 // pred_region
        _
      $region16: #{encoding3d_forward.1} parent=11 // pred_fallthru
        _
      // Predicated region
      $region17: #{encoding3d_forward.1} parent=11 // pred_check
        %p121 = pneg %p77
      $region18: #{encoding3d_forward.1} parent=11 // pred_check_branch
        %123 = sbr.rel (%p121) target = $region20
      $region19: #{encoding3d_forward.1} parent=11 // pred_region
        _
      $region20: #{encoding3d_forward.1} parent=11 // pred_fallthru
        _
    $region12: #{encoding3d_forward.1} parent=5 // pred_fallthru
      _
    %p124 = scmp.lt.s32.totalorder %s9, 2
    // Predicated region
    $region21: #{encoding3d_forward.1} parent=5 // pred_check
      %p125 = pneg %p124
    $region22: #{encoding3d_forward.1} parent=5 // pred_check_branch
      %127 = sbr.rel (%p125) target = $region24
    $region23: #{encoding3d_forward.1} parent=5 // pred_region
      // Predicated region
      $region25: #{encoding3d_forward.1} parent=23 // pred_check
        %p128 = pneg %p29
      $region26: #{encoding3d_forward.1} parent=23 // pred_check_branch
        %130 = sbr.rel (%p128) target = $region28
      $region27: #{encoding3d_forward.1} parent=23 // pred_region
        %s131 = smul.u32 4, %s9
        %p132 = scmp.lt.s32.totalorder %s131, 7
        %s133 = scalar_select %p132, %s131, 7
        %s134 = smul.addr %s133, 8
        %s135 = scalar_lea.vmem %s0, %s134
        %s136 = smul.u32 4, %s9
      $region28: #{encoding3d_forward.1} parent=23 // pred_fallthru
        _
    $region24: #{encoding3d_forward.1} parent=5 // pred_fallthru
      _
    %p137 = scmp.le.s32.totalorder 1, %s9
    %p138 = scmp.lt.s32.totalorder %s9, 3
    %p139 = pnand %p137, %p138
    %p140 = pneg %p139
    // Predicated region
    $region29: #{encoding3d_forward.1} parent=5 // pred_check
      _
    $region30: #{encoding3d_forward.1} parent=5 // pred_check_branch
      %142 = sbr.rel (%p139) target = $region32
    $region31: #{encoding3d_forward.1} parent=5 // pred_region
      %s143 = ssub.s32 %s9, 1
      %s144 = smul.u32 4, %s14
      %p145 = scmp.lt.s32.totalorder %s144, 7
      %s146 = scalar_select %p145, %s144, 7
      %s147 = smul.addr %s146, 8
      %s148 = scalar_lea.vmem %s0, %s147
      %p149 = pneg %p35
      %p150 = pneg %p32
      %p151 = pneg %p56
      %p152 = pneg %p53
      %p153 = pneg %p77
      %p154 = pneg %p74
      %p155 = pneg %p103
      %p156 = pneg %p100
      %s157 = smul.u32 4, %s14
      %p158 = scmp.lt.s32.totalorder %s157, 7
      %s159 = scalar_select %p158, %s157, 7
      %s160 = smul.addr %s159, 8
      %s161 = scalar_lea.vmem %s3, %s160
      %s162 = smul.u32 4, %s14
      %p163 = scmp.lt.s32.totalorder %s162, 7
      %s164 = scalar_select %p163, %s162, 7
      %s165 = smul.addr %s164, 8
      %s166 = scalar_lea.vmem %s0, %s165
      %s167 = smul.u32 4, %s14
      %s168 = smul.u32 4, %s14
      %p169 = scmp.lt.s32.totalorder %s168, 7
      %s170 = scalar_select %p169, %s168, 7
      %s171 = smul.addr %s170, 8
      %s172 = scalar_lea.vmem %s3, %s171
      %s173 = smul.u32 4, %s14
      %v174 = vld [vmem:[%s1] sm:$0x1]
      %v175 = vld [vmem:[%s1 + $0x1] sm:$0x1]
      %v176 = vld [vmem:[%s1 + $0x2] sm:$0x1]
      %v177 = vld [vmem:[%s2] sm:$0x1]
      %v178 = vld [vmem:[%s166] sm:$0xff]
      %v179 = vld [vmem:[%s166 + $0x8] sm:$0xff]
      %v180 = vld [vmem:[%s166 + $0x10] sm:$0xff]
      %v181 = vld [vmem:[%s166 + $0x18] sm:$0xff]
      %183 = vset.pattern.permute.xlu0 0
      %184 = vperm.xlu0 %183, %v178
      %v185 = vpop.permute.xlu0 %184
      %188 = vset.pattern.permute.xlu0 0
      %189 = vperm.xlu0 %188, %v179
      %v190 = vpop.permute.xlu0 %189
      %193 = vset.pattern.permute.xlu0 0
      %194 = vperm.xlu0 %193, %v180
      %v195 = vpop.permute.xlu0 %194
      %198 = vset.pattern.permute.xlu0 0
      %199 = vperm.xlu0 %198, %v181
      %v200 = vpop.permute.xlu0 %199
      %v202 = vlaneseq
      %v203 = vshrl.u32 %v202, 7
      %v204 = vsub.s32 0, %v203
      %v205 = vrot.slane %v174, %v204
      %v206 = vmul.f32 %v185, %v205
      %v207 = vmul.f32 %v190, %v205
      %v208 = vmul.f32 %v195, %v205
      %v209 = vmul.f32 %v200, %v205
      %210 = vset.pattern.permute.xlu0 1
      %211 = vperm.xlu0 %210, %v178
      %v212 = vpop.permute.xlu0 %211
      %214 = vset.pattern.permute.xlu0 1
      %215 = vperm.xlu0 %214, %v179
      %v216 = vpop.permute.xlu0 %215
      %218 = vset.pattern.permute.xlu0 1
      %219 = vperm.xlu0 %218, %v180
      %v220 = vpop.permute.xlu0 %219
      %222 = vset.pattern.permute.xlu0 1
      %223 = vperm.xlu0 %222, %v181
      %v224 = vpop.permute.xlu0 %223
      %v226 = vlaneseq
      %v227 = vshrl.u32 %v226, 7
      %v228 = vsub.s32 0, %v227
      %v229 = vrot.slane %v175, %v228
      %v230 = vmul.f32 %v212, %v229
      %v231 = vmul.f32 %v216, %v229
      %v232 = vmul.f32 %v220, %v229
      %v233 = vmul.f32 %v224, %v229
      %v234 = vadd.f32 %v206, %v230
      %v235 = vadd.f32 %v207, %v231
      %v236 = vadd.f32 %v208, %v232
      %v237 = vadd.f32 %v209, %v233
      %238 = vset.pattern.permute.xlu0 2
      %239 = vperm.xlu0 %238, %v178
      %v240 = vpop.permute.xlu0 %239
      %242 = vset.pattern.permute.xlu0 2
      %243 = vperm.xlu0 %242, %v179
      %v244 = vpop.permute.xlu0 %243
      %246 = vset.pattern.permute.xlu0 2
      %247 = vperm.xlu0 %246, %v180
      %v248 = vpop.permute.xlu0 %247
      %250 = vset.pattern.permute.xlu0 2
      %251 = vperm.xlu0 %250, %v181
      %v252 = vpop.permute.xlu0 %251
      %v254 = vlaneseq
      %v255 = vshrl.u32 %v254, 7
      %v256 = vsub.s32 0, %v255
      %v257 = vrot.slane %v176, %v256
      %v258 = vmul.f32 %v240, %v257
      %v259 = vmul.f32 %v244, %v257
      %v260 = vmul.f32 %v248, %v257
      %v261 = vmul.f32 %v252, %v257
      %v262 = vadd.f32 %v234, %v258
      %v263 = vadd.f32 %v235, %v259
      %v264 = vadd.f32 %v236, %v260
      %v265 = vadd.f32 %v237, %v261
      %v267 = vlaneseq
      %v268 = vshrl.u32 %v267, 7
      %v269 = vsub.s32 0, %v268
      %v270 = vrot.slane %v177, %v269
      %v272 = vadd.f32 %v262, %v270
      %v273 = vadd.f32 %v263, %v270
      %v274 = vadd.f32 %v264, %v270
      %v275 = vadd.f32 %v265, %v270
      %276 = vset.pattern.permute.xlu0 3
      %277 = vperm.xlu0 %276, %v178
      %v278 = vpop.permute.xlu0 %277
      %280 = vset.pattern.permute.xlu0 3
      %281 = vperm.xlu0 %280, %v179
      %v282 = vpop.permute.xlu0 %281
      %284 = vset.pattern.permute.xlu0 3
      %285 = vperm.xlu0 %284, %v180
      %v286 = vpop.permute.xlu0 %285
      %288 = vset.pattern.permute.xlu0 3
      %289 = vperm.xlu0 %288, %v181
      %v290 = vpop.permute.xlu0 %289
      %v292 = vmul.f32 %v278, %v205
      %v293 = vmul.f32 %v282, %v205
      %v294 = vmul.f32 %v286, %v205
      %v295 = vmul.f32 %v290, %v205
      %296 = vset.pattern.permute.xlu0 4
      %297 = vperm.xlu0 %296, %v178
      %v298 = vpop.permute.xlu0 %297
      %300 = vset.pattern.permute.xlu0 4
      %301 = vperm.xlu0 %300, %v179
      %v302 = vpop.permute.xlu0 %301
      %304 = vset.pattern.permute.xlu0 4
      %305 = vperm.xlu0 %304, %v180
      %v306 = vpop.permute.xlu0 %305
      %308 = vset.pattern.permute.xlu0 4
      %309 = vperm.xlu0 %308, %v181
      %v310 = vpop.permute.xlu0 %309
      %v312 = vmul.f32 %v298, %v229
      %v313 = vmul.f32 %v302, %v229
      %v314 = vmul.f32 %v306, %v229
      %v315 = vmul.f32 %v310, %v229
      %v316 = vadd.f32 %v292, %v312
      %v317 = vadd.f32 %v293, %v313
      %v318 = vadd.f32 %v294, %v314
      %v319 = vadd.f32 %v295, %v315
      %320 = vset.pattern.permute.xlu0 5
      %321 = vperm.xlu0 %320, %v178
      %v322 = vpop.permute.xlu0 %321
      %324 = vset.pattern.permute.xlu0 5
      %325 = vperm.xlu0 %324, %v179
      %v326 = vpop.permute.xlu0 %325
      %328 = vset.pattern.permute.xlu0 5
      %329 = vperm.xlu0 %328, %v180
      %v330 = vpop.permute.xlu0 %329
      %332 = vset.pattern.permute.xlu0 5
      %333 = vperm.xlu0 %332, %v181
      %v334 = vpop.permute.xlu0 %333
      %v336 = vmul.f32 %v322, %v257
      %v337 = vmul.f32 %v326, %v257
      %v338 = vmul.f32 %v330, %v257
      %v339 = vmul.f32 %v334, %v257
      %v340 = vadd.f32 %v316, %v336
      %v341 = vadd.f32 %v317, %v337
      %v342 = vadd.f32 %v318, %v338
      %v343 = vadd.f32 %v319, %v339
      %v344 = vadd.f32 %v340, %v270
      %v345 = vadd.f32 %v341, %v270
      %v346 = vadd.f32 %v342, %v270
      %v347 = vadd.f32 %v343, %v270
      %352 = vrot.lane.b32.xlu0 %v344, 64
      %v353 = vpop.permute.xlu0 %352
      %354 = vrot.lane.b32.xlu0 %v345, 64
      %v355 = vpop.permute.xlu0 %354
      %356 = vrot.lane.b32.xlu0 %v346, 64
      %v357 = vpop.permute.xlu0 %356
      %358 = vrot.lane.b32.xlu0 %v347, 64
      %v359 = vpop.permute.xlu0 %358
      %vm364 = vcmask 523264
      %v365 = vsel %vm364, %v272, %v353
      %v366 = vsel %vm364, %v273, %v355
      %v367 = vsel %vm364, %v274, %v357
      %v368 = vsel %vm364, %v275, %v359
      %v369 = vand.u32 2147483647, %v365
      %vm370 = vcmp.le.f32.partialorder %v369, 0.7853982
      %vm371 = vcmp.lt.s32.totalorder %v365, 0
      %v372 = vand.u32 %v365, 2139095040
      %v373 = vshrl.u32 %v372, 23
      %v374 = vsub.s32 %v373, 127
      %v375 = vand.u32 2147483647, %v365
      %v376 = vand.u32 %v375, 8388607
      %v377 = vor.u32 %v376, 8388608
      %v378 = vsub.s32 0, %v377
      %v379 = vadd.s32 %v374, 1
      %vm380 = vcmp.gt.s32.totalorder %v379, 0
      %v381 = vsel %vm380, %v379, 0
      %v382 = vshrl.u32 %v381, 5
      %v383 = vand.u32 %v381, 31
      %v384 = vsub.s32 32, %v383
      %v385 = vshrl.u32 683565275, %v384
      %v386 = vshll.u32 683565275, %v383
      %v387 = vshrl.u32 2475754826, %v384
      %v388 = vor.u32 %v386, %v387
      %v389 = vshll.u32 2475754826, %v383
      %v390 = vshrl.u32 2131351028, %v384
      %v391 = vor.u32 %v389, %v390
      %v392 = vshll.u32 2131351028, %v383
      %v393 = vshrl.u32 2102212464, %v384
      %v394 = vor.u32 %v392, %v393
      %v395 = vshll.u32 2102212464, %v383
      %v396 = vshrl.u32 920167782, %v384
      %v397 = vor.u32 %v395, %v396
      %v398 = vshll.u32 920167782, %v383
      %v399 = vshrl.u32 1326507024, %v384
      %v400 = vor.u32 %v398, %v399
      %vm401 = vcmp.lt.s32.totalorder %v382, 1
      %vm402 = vcmp.lt.s32.totalorder %v382, 2
      %vm403 = vcmp.lt.s32.totalorder %v382, 3
      %vm404 = vcmp.lt.s32.totalorder %v382, 4
      %v405 = vsel %vm401, %v385, %v388
      %v406 = vsel %vm404, %v394, 2102212464
      %v407 = vsel %vm403, %v391, %v406
      %v408 = vsel %vm402, %v405, %v407
      %v409 = vsel %vm401, %v388, %v391
      %v410 = vsel %vm404, %v397, 920167782
      %v411 = vsel %vm403, %v394, %v410
      %v412 = vsel %vm402, %v409, %v411
      %v413 = vsel %vm401, %v391, %v394
      %v414 = vsel %vm404, %v400, 1326507024
      %v415 = vsel %vm403, %v397, %v414
      %v416 = vsel %vm402, %v413, %v415
      %v417 = vshll.u32 %v377, 8
      %v418 = vmul.u32.u64.compose %v417, %v416
      %v419 = vextract.low.u32 %v418
      %v420 = vextract.high.u32 %v418
      %v421 = vmul.u32.u64.compose %v417, %v412
      %v422 = vextract.low.u32 %v421
      %v423 = vextract.high.u32 %v421
      %v424 = vmul.u32 %v417, %v408
      %v425 = vadd.s32 %v420, %v422
      %vm426 = vc.u32 %v420, %v422
      %v427 = vadd.s32 %v423, 1
      %v428 = vsel %vm426, %v427, %v423
      %v429 = vadd.s32 %v424, %v428
      %v430 = vadd.s32 %v429, 536870912
      %v431 = vshrl.u32 %v430, 30
      %v432 = vshll.u32 %v431, 30
      %v433 = vsub.s32 %v429, %v432
      %vm434 = vcmp.lt.s32.totalorder %v433, 0
      %v435 = vsub.s32 0, %v433
      %v436 = vsel %vm434, %v435, %v433
      %v437 = vclz %v436
      %v438 = vsub.s32 %v437, 2
      %vm439 = vcmp.gt.s32.totalorder 0, %v438
      %v440 = vsel %vm439, 0, %v438
      %v441 = vsub.s32 32, %v440
      %v442 = vshll.u32 %v433, %v440
      %v443 = vshrl.u32 %v425, %v441
      %v444 = vor.u32 %v442, %v443
      %v445 = vsub.s32 4294967266, %v440
      %v446 = vadd.s32 %v445, 127
      %v447 = vshll.u32 %v446, 23
      %v448 = vor.u32 4788187, %v447
      %v449 = vand.u32 2147483647, %v448
      %v451 = vcvt.s32.f32 %v444
      %v452 = vmul.f32 %v451, %v449
      %v453 = vxor.u32 %v452, 2147483648
      %v454 = vsel %vm371, %v453, %v452
      %v455 = vsub.s32 4, %v431
      %v456 = vsel %vm371, %v455, %v431
      %v457 = vsel %vm370, %v365, %v454
      %v458 = vsel %vm370, 0, %v456
      %v459 = vcosq.f32.pop %v457
      %v460 = vsinq.f32.pop %v457
      %vm461 = vweird.f32 %v365
      %v462 = vadd.s32 %v458, 3
      %v463 = vand.u32 %v462, 3
      %vm464 = vcmp.lt.s32.totalorder %v463, 2
      %vm465 = vcmp.eq.s32.totalorder %v463, 0
      %v466 = vxor.u32 %v460, 2147483648
      %v467 = vsel %vm465, %v459, %v466
      %vm468 = vcmp.eq.s32.totalorder %v463, 2
      %v469 = vxor.u32 %v459, 2147483648
      %v470 = vsel %vm468, %v469, %v460
      %v471 = vsel %vm464, %v467, %v470
      %v472 = vsel %vm461, nan, %v471
      %v473 = vand.u32 2147483647, %v366
      %vm474 = vcmp.le.f32.partialorder %v473, 0.7853982
      %vm475 = vcmp.lt.s32.totalorder %v366, 0
      %v476 = vand.u32 %v366, 2139095040
      %v477 = vshrl.u32 %v476, 23
      %v478 = vsub.s32 %v477, 127
      %v479 = vand.u32 2147483647, %v366
      %v480 = vand.u32 %v479, 8388607
      %v481 = vor.u32 %v480, 8388608
      %v482 = vsub.s32 0, %v481
      %v483 = vadd.s32 %v478, 1
      %vm484 = vcmp.gt.s32.totalorder %v483, 0
      %v485 = vsel %vm484, %v483, 0
      %v486 = vshrl.u32 %v485, 5
      %v487 = vand.u32 %v485, 31
      %v488 = vsub.s32 32, %v487
      %v489 = vshrl.u32 683565275, %v488
      %v490 = vshll.u32 683565275, %v487
      %v491 = vshrl.u32 2475754826, %v488
      %v492 = vor.u32 %v490, %v491
      %v493 = vshll.u32 2475754826, %v487
      %v494 = vshrl.u32 2131351028, %v488
      %v495 = vor.u32 %v493, %v494
      %v496 = vshll.u32 2131351028, %v487
      %v497 = vshrl.u32 2102212464, %v488
      %v498 = vor.u32 %v496, %v497
      %v499 = vshll.u32 2102212464, %v487
      %v500 = vshrl.u32 920167782, %v488
      %v501 = vor.u32 %v499, %v500
      %v502 = vshll.u32 920167782, %v487
      %v503 = vshrl.u32 1326507024, %v488
      %v504 = vor.u32 %v502, %v503
      %vm505 = vcmp.lt.s32.totalorder %v486, 1
      %vm506 = vcmp.lt.s32.totalorder %v486, 2
      %vm507 = vcmp.lt.s32.totalorder %v486, 3
      %vm508 = vcmp.lt.s32.totalorder %v486, 4
      %v509 = vsel %vm505, %v489, %v492
      %v510 = vsel %vm508, %v498, 2102212464
      %v511 = vsel %vm507, %v495, %v510
      %v512 = vsel %vm506, %v509, %v511
      %v513 = vsel %vm505, %v492, %v495
      %v514 = vsel %vm508, %v501, 920167782
      %v515 = vsel %vm507, %v498, %v514
      %v516 = vsel %vm506, %v513, %v515
      %v517 = vsel %vm505, %v495, %v498
      %v518 = vsel %vm508, %v504, 1326507024
      %v519 = vsel %vm507, %v501, %v518
      %v520 = vsel %vm506, %v517, %v519
      %v521 = vshll.u32 %v481, 8
      %v522 = vmul.u32.u64.compose %v521, %v520
      %v523 = vextract.low.u32 %v522
      %v524 = vextract.high.u32 %v522
      %v525 = vmul.u32.u64.compose %v521, %v516
      %v526 = vextract.low.u32 %v525
      %v527 = vextract.high.u32 %v525
      %v528 = vmul.u32 %v521, %v512
      %v529 = vadd.s32 %v524, %v526
      %vm530 = vc.u32 %v524, %v526
      %v531 = vadd.s32 %v527, 1
      %v532 = vsel %vm530, %v531, %v527
      %v533 = vadd.s32 %v528, %v532
      %v534 = vadd.s32 %v533, 536870912
      %v535 = vshrl.u32 %v534, 30
      %v536 = vshll.u32 %v535, 30
      %v537 = vsub.s32 %v533, %v536
      %vm538 = vcmp.lt.s32.totalorder %v537, 0
      %v539 = vsub.s32 0, %v537
      %v540 = vsel %vm538, %v539, %v537
      %v541 = vclz %v540
      %v542 = vsub.s32 %v541, 2
      %vm543 = vcmp.gt.s32.totalorder 0, %v542
      %v544 = vsel %vm543, 0, %v542
      %v545 = vsub.s32 32, %v544
      %v546 = vshll.u32 %v537, %v544
      %v547 = vshrl.u32 %v529, %v545
      %v548 = vor.u32 %v546, %v547
      %v549 = vsub.s32 4294967266, %v544
      %v550 = vadd.s32 %v549, 127
      %v551 = vshll.u32 %v550, 23
      %v552 = vor.u32 4788187, %v551
      %v553 = vand.u32 2147483647, %v552
      %v555 = vcvt.s32.f32 %v548
      %v556 = vmul.f32 %v555, %v553
      %v557 = vxor.u32 %v556, 2147483648
      %v558 = vsel %vm475, %v557, %v556
      %v559 = vsub.s32 4, %v535
      %v560 = vsel %vm475, %v559, %v535
      %v561 = vsel %vm474, %v366, %v558
      %v562 = vsel %vm474, 0, %v560
      %v563 = vcosq.f32.pop %v561
      %v564 = vsinq.f32.pop %v561
      %vm565 = vweird.f32 %v366
      %v566 = vadd.s32 %v562, 3
      %v567 = vand.u32 %v566, 3
      %vm568 = vcmp.lt.s32.totalorder %v567, 2
      %vm569 = vcmp.eq.s32.totalorder %v567, 0
      %v570 = vxor.u32 %v564, 2147483648
      %v571 = vsel %vm569, %v563, %v570
      %vm572 = vcmp.eq.s32.totalorder %v567, 2
      %v573 = vxor.u32 %v563, 2147483648
      %v574 = vsel %vm572, %v573, %v564
      %v575 = vsel %vm568, %v571, %v574
      %v576 = vsel %vm565, nan, %v575
      %v577 = vand.u32 2147483647, %v367
      %vm578 = vcmp.le.f32.partialorder %v577, 0.7853982
      %vm579 = vcmp.lt.s32.totalorder %v367, 0
      %v580 = vand.u32 %v367, 2139095040
      %v581 = vshrl.u32 %v580, 23
      %v582 = vsub.s32 %v581, 127
      %v583 = vand.u32 2147483647, %v367
      %v584 = vand.u32 %v583, 8388607
      %v585 = vor.u32 %v584, 8388608
      %v586 = vsub.s32 0, %v585
      %v587 = vadd.s32 %v582, 1
      %vm588 = vcmp.gt.s32.totalorder %v587, 0
      %v589 = vsel %vm588, %v587, 0
      %v590 = vshrl.u32 %v589, 5
      %v591 = vand.u32 %v589, 31
      %v592 = vsub.s32 32, %v591
      %v593 = vshrl.u32 683565275, %v592
      %v594 = vshll.u32 683565275, %v591
      %v595 = vshrl.u32 2475754826, %v592
      %v596 = vor.u32 %v594, %v595
      %v597 = vshll.u32 2475754826, %v591
      %v598 = vshrl.u32 2131351028, %v592
      %v599 = vor.u32 %v597, %v598
      %v600 = vshll.u32 2131351028, %v591
      %v601 = vshrl.u32 2102212464, %v592
      %v602 = vor.u32 %v600, %v601
      %v603 = vshll.u32 2102212464, %v591
      %v604 = vshrl.u32 920167782, %v592
      %v605 = vor.u32 %v603, %v604
      %v606 = vshll.u32 920167782, %v591
      %v607 = vshrl.u32 1326507024, %v592
      %v608 = vor.u32 %v606, %v607
      %vm609 = vcmp.lt.s32.totalorder %v590, 1
      %vm610 = vcmp.lt.s32.totalorder %v590, 2
      %vm611 = vcmp.lt.s32.totalorder %v590, 3
      %vm612 = vcmp.lt.s32.totalorder %v590, 4
      %v613 = vsel %vm609, %v593, %v596
      %v614 = vsel %vm612, %v602, 2102212464
      %v615 = vsel %vm611, %v599, %v614
      %v616 = vsel %vm610, %v613, %v615
      %v617 = vsel %vm609, %v596, %v599
      %v618 = vsel %vm612, %v605, 920167782
      %v619 = vsel %vm611, %v602, %v618
      %v620 = vsel %vm610, %v617, %v619
      %v621 = vsel %vm609, %v599, %v602
      %v622 = vsel %vm612, %v608, 1326507024
      %v623 = vsel %vm611, %v605, %v622
      %v624 = vsel %vm610, %v621, %v623
      %v625 = vshll.u32 %v585, 8
      %v626 = vmul.u32.u64.compose %v625, %v624
      %v627 = vextract.low.u32 %v626
      %v628 = vextract.high.u32 %v626
      %v629 = vmul.u32.u64.compose %v625, %v620
      %v630 = vextract.low.u32 %v629
      %v631 = vextract.high.u32 %v629
      %v632 = vmul.u32 %v625, %v616
      %v633 = vadd.s32 %v628, %v630
      %vm634 = vc.u32 %v628, %v630
      %v635 = vadd.s32 %v631, 1
      %v636 = vsel %vm634, %v635, %v631
      %v637 = vadd.s32 %v632, %v636
      %v638 = vadd.s32 %v637, 536870912
      %v639 = vshrl.u32 %v638, 30
      %v640 = vshll.u32 %v639, 30
      %v641 = vsub.s32 %v637, %v640
      %vm642 = vcmp.lt.s32.totalorder %v641, 0
      %v643 = vsub.s32 0, %v641
      %v644 = vsel %vm642, %v643, %v641
      %v645 = vclz %v644
      %v646 = vsub.s32 %v645, 2
      %vm647 = vcmp.gt.s32.totalorder 0, %v646
      %v648 = vsel %vm647, 0, %v646
      %v649 = vsub.s32 32, %v648
      %v650 = vshll.u32 %v641, %v648
      %v651 = vshrl.u32 %v633, %v649
      %v652 = vor.u32 %v650, %v651
      %v653 = vsub.s32 4294967266, %v648
      %v654 = vadd.s32 %v653, 127
      %v655 = vshll.u32 %v654, 23
      %v656 = vor.u32 4788187, %v655
      %v657 = vand.u32 2147483647, %v656
      %v659 = vcvt.s32.f32 %v652
      %v660 = vmul.f32 %v659, %v657
      %v661 = vxor.u32 %v660, 2147483648
      %v662 = vsel %vm579, %v661, %v660
      %v663 = vsub.s32 4, %v639
      %v664 = vsel %vm579, %v663, %v639
      %v665 = vsel %vm578, %v367, %v662
      %v666 = vsel %vm578, 0, %v664
      %v667 = vcosq.f32.pop %v665
      %v668 = vsinq.f32.pop %v665
      %vm669 = vweird.f32 %v367
      %v670 = vadd.s32 %v666, 3
      %v671 = vand.u32 %v670, 3
      %vm672 = vcmp.lt.s32.totalorder %v671, 2
      %vm673 = vcmp.eq.s32.totalorder %v671, 0
      %v674 = vxor.u32 %v668, 2147483648
      %v675 = vsel %vm673, %v667, %v674
      %vm676 = vcmp.eq.s32.totalorder %v671, 2
      %v677 = vxor.u32 %v667, 2147483648
      %v678 = vsel %vm676, %v677, %v668
      %v679 = vsel %vm672, %v675, %v678
      %v680 = vsel %vm669, nan, %v679
      %v681 = vand.u32 2147483647, %v368
      %vm682 = vcmp.le.f32.partialorder %v681, 0.7853982
      %vm683 = vcmp.lt.s32.totalorder %v368, 0
      %v684 = vand.u32 %v368, 2139095040
      %v685 = vshrl.u32 %v684, 23
      %v686 = vsub.s32 %v685, 127
      %v687 = vand.u32 2147483647, %v368
      %v688 = vand.u32 %v687, 8388607
      %v689 = vor.u32 %v688, 8388608
      %v690 = vsub.s32 0, %v689
      %v691 = vadd.s32 %v686, 1
      %vm692 = vcmp.gt.s32.totalorder %v691, 0
      %v693 = vsel %vm692, %v691, 0
      %v694 = vshrl.u32 %v693, 5
      %v695 = vand.u32 %v693, 31
      %v696 = vsub.s32 32, %v695
      %v697 = vshrl.u32 683565275, %v696
      %v698 = vshll.u32 683565275, %v695
      %v699 = vshrl.u32 2475754826, %v696
      %v700 = vor.u32 %v698, %v699
      %v701 = vshll.u32 2475754826, %v695
      %v702 = vshrl.u32 2131351028, %v696
      %v703 = vor.u32 %v701, %v702
      %v704 = vshll.u32 2131351028, %v695
      %v705 = vshrl.u32 2102212464, %v696
      %v706 = vor.u32 %v704, %v705
      %v707 = vshll.u32 2102212464, %v695
      %v708 = vshrl.u32 920167782, %v696
      %v709 = vor.u32 %v707, %v708
      %v710 = vshll.u32 920167782, %v695
      %v711 = vshrl.u32 1326507024, %v696
      %v712 = vor.u32 %v710, %v711
      %vm713 = vcmp.lt.s32.totalorder %v694, 1
      %vm714 = vcmp.lt.s32.totalorder %v694, 2
      %vm715 = vcmp.lt.s32.totalorder %v694, 3
      %vm716 = vcmp.lt.s32.totalorder %v694, 4
      %v717 = vsel %vm713, %v697, %v700
      %v718 = vsel %vm716, %v706, 2102212464
      %v719 = vsel %vm715, %v703, %v718
      %v720 = vsel %vm714, %v717, %v719
      %v721 = vsel %vm713, %v700, %v703
      %v722 = vsel %vm716, %v709, 920167782
      %v723 = vsel %vm715, %v706, %v722
      %v724 = vsel %vm714, %v721, %v723
      %v725 = vsel %vm713, %v703, %v706
      %v726 = vsel %vm716, %v712, 1326507024
      %v727 = vsel %vm715, %v709, %v726
      %v728 = vsel %vm714, %v725, %v727
      %v729 = vshll.u32 %v689, 8
      %v730 = vmul.u32.u64.compose %v729, %v728
      %v731 = vextract.low.u32 %v730
      %v732 = vextract.high.u32 %v730
      %v733 = vmul.u32.u64.compose %v729, %v724
      %v734 = vextract.low.u32 %v733
      %v735 = vextract.high.u32 %v733
      %v736 = vmul.u32 %v729, %v720
      %v737 = vadd.s32 %v732, %v734
      %vm738 = vc.u32 %v732, %v734
      %v739 = vadd.s32 %v735, 1
      %v740 = vsel %vm738, %v739, %v735
      %v741 = vadd.s32 %v736, %v740
      %v742 = vadd.s32 %v741, 536870912
      %v743 = vshrl.u32 %v742, 30
      %v744 = vshll.u32 %v743, 30
      %v745 = vsub.s32 %v741, %v744
      %vm746 = vcmp.lt.s32.totalorder %v745, 0
      %v747 = vsub.s32 0, %v745
      %v748 = vsel %vm746, %v747, %v745
      %v749 = vclz %v748
      %v750 = vsub.s32 %v749, 2
      %vm751 = vcmp.gt.s32.totalorder 0, %v750
      %v752 = vsel %vm751, 0, %v750
      %v753 = vsub.s32 32, %v752
      %v754 = vshll.u32 %v745, %v752
      %v755 = vshrl.u32 %v737, %v753
      %v756 = vor.u32 %v754, %v755
      %v757 = vsub.s32 4294967266, %v752
      %v758 = vadd.s32 %v757, 127
      %v759 = vshll.u32 %v758, 23
      %v760 = vor.u32 4788187, %v759
      %v761 = vand.u32 2147483647, %v760
      %v763 = vcvt.s32.f32 %v756
      %v764 = vmul.f32 %v763, %v761
      %v765 = vxor.u32 %v764, 2147483648
      %v766 = vsel %vm683, %v765, %v764
      %v767 = vsub.s32 4, %v743
      %v768 = vsel %vm683, %v767, %v743
      %v769 = vsel %vm682, %v368, %v766
      %v770 = vsel %vm682, 0, %v768
      %v771 = vcosq.f32.pop %v769
      %v772 = vsinq.f32.pop %v769
      %vm773 = vweird.f32 %v368
      %v774 = vadd.s32 %v770, 3
      %v775 = vand.u32 %v774, 3
      %vm776 = vcmp.lt.s32.totalorder %v775, 2
      %vm777 = vcmp.eq.s32.totalorder %v775, 0
      %v778 = vxor.u32 %v772, 2147483648
      %v779 = vsel %vm777, %v771, %v778
      %vm780 = vcmp.eq.s32.totalorder %v775, 2
      %v781 = vxor.u32 %v771, 2147483648
      %v782 = vsel %vm780, %v781, %v772
      %v783 = vsel %vm776, %v779, %v782
      %v784 = vsel %vm773, nan, %v783
      %785 = vst [vmem:[%s172] sm:$0xff] %v472
      %786 = vst [vmem:[%s172 + $0x8] sm:$0xff] %v576
      %787 = vst [vmem:[%s172 + $0x10] sm:$0xff] %v680
      %788 = vst [vmem:[%s172 + $0x18] sm:$0xff] %v784
      %s789 = smul.u32 4, %s14
      %p790 = scmp.lt.s32.totalorder %s789, 7
      %s791 = scalar_select %p790, %s789, 7
      %s792 = smul.addr %s791, 8
      %s793 = scalar_lea.vmem %s3, %s792
      // Predicated region
      $region33: #{encoding3d_forward.1} parent=31 // pred_check
        %p794 = pneg %p100
      $region34: #{encoding3d_forward.1} parent=31 // pred_check_branch
        %796 = sbr.rel (%p794) target = $region36
      $region35: #{encoding3d_forward.1} parent=31 // pred_region
        %s797 = smul.u32 4, %s14
      $region36: #{encoding3d_forward.1} parent=31 // pred_fallthru
        _
    $region32: #{encoding3d_forward.1} parent=5 // pred_fallthru
      _
    %p798 = scmp.le.s32.totalorder 2, %s9
    // Predicated region
    $region37: #{encoding3d_forward.1} parent=5 // pred_check
      %p799 = pneg %p798
    $region38: #{encoding3d_forward.1} parent=5 // pred_check_branch
      %801 = sbr.rel (%p799) target = $region40
    $region39: #{encoding3d_forward.1} parent=5 // pred_region
      %s802 = ssub.s32 %s9, 2
      // Predicated region
      $region41: #{encoding3d_forward.1} parent=39 // pred_check
        %p803 = pneg %p106
      $region42: #{encoding3d_forward.1} parent=39 // pred_check_branch
        %805 = sbr.rel (%p803) target = $region44
      $region43: #{encoding3d_forward.1} parent=39 // pred_region
        %s806 = smul.u32 4, %s15
        %p807 = scmp.lt.s32.totalorder %s806, 7
        %s808 = scalar_select %p807, %s806, 7
        %s809 = smul.addr %s808, 8
        %s810 = scalar_lea.vmem %s3, %s809
      $region44: #{encoding3d_forward.1} parent=39 // pred_fallthru
        _
    $region40: #{encoding3d_forward.1} parent=5 // pred_fallthru
      _
  $region6: #{encoding3d_forward.1} parent=0 // loop_footer
    %s13 = sadd.s32 1, %s9
  $region7: #{encoding3d_forward.1} parent=0 // loop_footer_branch
    %8 = sbr.rel target = $region3
  $region8: #{encoding3d_forward.1} parent=0 // loop_exit
    _

</llo_original>
